<compile_context>
chip_gen: v5e
topology: v5e:2x2
jax: 0.10.0
libtpu: 0.0.40
codegen_flags: <defaults>
</compile_context>

<pallas_src>
import functools

import jax
import jax.numpy as jnp
from jax.experimental import pallas as pl
from jax.experimental.pallas import tpu as pltpu

BN_EPS = 1e-5


def _choose_tile_rows(Ho, Wo, Wp, planes, cin, cout, stride, batch,
                      budget_bytes=12 << 20):
    """Largest divisor of Ho whose per-tile VMEM footprint fits the budget.

    Budget stays well under v7x's 64 MiB/TC.  When batch >= 2 the batch grid
    axis already feeds both v7x TensorCores, so the full image is taken
    whenever it fits (best for single-core v5e/v6e); with batch == 1 keep at
    least 2 row tiles for core-level parallelism.
    """
    cap = Ho if batch >= 2 else max(1, Ho // 2)
    best = 1
    for th in range(1, cap + 1):
        if Ho % th:
            continue
        winlen = (stride * (th - 1) + 4) * Wp
        n_dw = th * Wp if stride == 1 else (stride * (th - 1) + 1) * Wp
        n_out = th * Wp if stride == 1 else th * Wo
        est = 4 * (2 * (cin + 1) * winlen + planes * winlen
                   + 3 * planes * n_dw + 2 * cout * n_out
                   + (n_dw * n_out if stride > 1 else 0))
        if est <= budget_bytes:
            best = th
    return best


# --------------------------- fused Block kernel -----------------------------
def _block_kernel(x_ref, w1_ref, wdw_ref, b2_ref, w3_ref, b3_ref, *rest,
                  mode, Wp, stride, n_dw, n_out, cin):
    if mode == "conv":
        wsc_ref, o_ref = rest
    elif mode == "identity":
        (o_ref,) = rest
    else:                       # stride > 1: no shortcut, selection matmul
        sel_ref, o_ref = rest

    # channel-major window: sublanes = channels (+1 `valid` chan), lanes = flat
    # padded spatial positions of this row tile (incl. halo rows).
    xm = x_ref[0, 0]                                      # (cin+1, winlen)

    # ---- expand 1x1 conv: BN scale folded into w1, BN bias rides the `valid`
    # channel so zero-padded positions stay exactly zero after the ReLU.
    h = jnp.maximum(
        jnp.dot(w1_ref[...], xm, preferred_element_type=jnp.float32), 0.0)

    # ---- depthwise 3x3: nine statically lane-shifted madds at full lane
    # occupancy; per-channel tap weights broadcast from the sublane dim.
    wdw = wdw_ref[...]                                    # (planes, 9)
    acc = h[:, 0:n_dw] * wdw[:, 0:1]
    for k in range(1, 9):
        dy, dx = divmod(k, 3)
        off = dy * Wp + dx
        acc = acc + h[:, off:off + n_dw] * wdw[:, k:k + 1]
    h2 = jnp.maximum(acc + b2_ref[...], 0.0)              # (planes, n_dw)

    if stride > 1:
        # one batched 0/1 selection matmul picks the strided rows/columns
        h2 = jnp.dot(h2, sel_ref[...], preferred_element_type=jnp.float32)

    # ---- project 1x1 conv + BN bias --------------------------------------
    y = jnp.dot(w3_ref[...], h2,
                preferred_element_type=jnp.float32) + b3_ref[...]

    if mode == "conv":          # 1x1-conv shortcut (BN bias via valid chan)
        y = y + jnp.dot(wsc_ref[...], xm[:, Wp + 1:Wp + 1 + n_out],
                        preferred_element_type=jnp.float32)
    elif mode == "identity":    # identity shortcut
        y = y + xm[0:cin, Wp + 1:Wp + 1 + n_out]

    # single lane-dense store of the whole tile
    o_ref[0, 0] = y


# --------------------------- wrapper -----------------------------------------
def block_forward(x, params, stride):
    """x: NCHW float32 activations; params: weights + eval-mode folded BN."""
    n, cin, H, W = x.shape
    planes = params["w1"].shape[1]
    cout = params["w3"].shape[1]
    s = stride
    Ho = (H - 1) // s + 1
    Wo = (W - 1) // s + 1
    Wp = -((W + 2) // -8) * 8               # padded row stride, multiple of 8

    if s == 1:
        mode = "conv" if cin != cout else "identity"
    else:
        mode = "none"

    TH = _choose_tile_rows(Ho, Wo, Wp, planes, cin, cout, s, n)
    RT = Ho // TH
    L1 = s * (TH - 1) + 4                   # window rows (3x3 halo + 1 spare)
    winlen = L1 * Wp
    n_dw = TH * Wp if s == 1 else (s * (TH - 1) + 1) * Wp
    n_out = TH * Wp if s == 1 else TH * Wo

    # ---- fold BN scales into the weights; BN biases become extra weight rows
    # driven by the `valid` channel (expand + conv-shortcut) ------------------
    w1T = jnp.concatenate([params["w1"] * params["s1"], params["b1"]],
                          axis=0).T                            # (planes, cin+1)
    wdwT = (params["wdw"] * params["s2"].reshape(1, 1, -1)
            ).reshape(9, planes).T                             # (planes, 9)
    b2c = params["b2"].reshape(planes, 1)
    w3T = (params["w3"] * params["s3"]).T                      # (cout, planes)
    b3c = params["b3"].reshape(cout, 1)

    # ---- channel-major zero-padded input + valid channel; per-tile windows
    # (with halo) are materialized by XLA so the kernel never slices
    # dynamically and each grid step DMAs only its own window. ---------------
    xpad = jnp.pad(x, ((0, 0), (0, 0), (1, 2), (1, Wp - W - 1)))
    valid = jnp.zeros((H + 3, Wp), jnp.float32).at[1:H + 1, 1:W + 1].set(1.0)
    valid = jnp.broadcast_to(valid, (n, 1, H + 3, Wp))
    xaug = jnp.concatenate([xpad, valid], axis=1)              # (n,cin+1,H+3,Wp)
    r_idx = (jnp.arange(RT) * (TH * s))[:, None] + jnp.arange(L1)[None, :]
    xwin = xaug[:, :, r_idx, :]                                # (n,cin+1,RT,L1,Wp)
    xwin = xwin.transpose(0, 2, 1, 3, 4).reshape(n, RT, cin + 1, winlen)

    full2 = lambda nn, j: (0, 0)
    args = [xwin, w1T, wdwT, b2c, w3T, b3c]
    in_specs = [
        pl.BlockSpec((1, 1, cin + 1, winlen), lambda nn, j: (nn, j, 0, 0)),
        pl.BlockSpec((planes, cin + 1), full2),
        pl.BlockSpec((planes, 9), full2),
        pl.BlockSpec((planes, 1), full2),
        pl.BlockSpec((cout, planes), full2),
        pl.BlockSpec((cout, 1), full2),
    ]
    if mode == "conv":
        wscT = jnp.concatenate([params["wsc"] * params["ssc"], params["bsc"]],
                               axis=0).T                       # (cout, cin+1)
        args.append(wscT)
        in_specs.append(pl.BlockSpec((cout, cin + 1), full2))
    if s > 1:
        # precomputed 0/1 selection matrix: flat stride-1 depthwise position
        # -> strided output position (rows and columns in one matmul).
        pos = jnp.arange(n_dw)
        tgt = (s * jnp.arange(TH)[:, None] * Wp
               + s * jnp.arange(Wo)[None, :]).reshape(-1)
        sel = (pos[:, None] == tgt[None, :]).astype(jnp.float32)
        args.append(sel)
        in_specs.append(pl.BlockSpec((n_dw, n_out), full2))

    est = 4 * (2 * (cin + 1) * winlen + planes * winlen + 3 * planes * n_dw
               + 2 * cout * n_out + (n_dw * n_out if s > 1 else 0))
    vmem_limit = int(min(48 << 20, max(32 << 20, 6 * est)))    # v7x-safe cap

    kernel = functools.partial(_block_kernel, mode=mode, Wp=Wp, stride=s,
                               n_dw=n_dw, n_out=n_out, cin=cin)
    out = pl.pallas_call(
        kernel,
        out_shape=jax.ShapeDtypeStruct((n, RT, cout, n_out), jnp.float32),
        grid=(n, RT),
        in_specs=in_specs,
        out_specs=pl.BlockSpec((1, 1, cout, n_out), lambda nn, j: (nn, j, 0, 0)),
        compiler_params=pltpu.CompilerParams(
            dimension_semantics=("parallel", "parallel"),
            vmem_limit_bytes=vmem_limit),
    )(*args)

    # layout plumbing (XLA side): drop the padded junk columns, back to NCHW.
    if s == 1:
        out = out.reshape(n, RT, cout, TH, Wp).transpose(0, 2, 1, 3, 4)
        out = out.reshape(n, cout, Ho, Wp)[:, :, :, :W]
    else:
        out = out.reshape(n, RT, cout, TH, Wo).transpose(0, 2, 1, 3, 4)
        out = out.reshape(n, cout, Ho, Wo)
    return out


# --------------------------- pure-JAX reference ------------------------------
def reference_block(x, params, stride):
    cin = x.shape[1]
    planes = params["w1"].shape[1]
    cout = params["w3"].shape[1]

    def bn(v, s, b):
        return v * s.reshape(1, -1, 1, 1) + b.reshape(1, -1, 1, 1)

    h1 = jnp.einsum("nchw,cf->nfhw", x, params["w1"], precision="highest")
    h1 = jnp.maximum(bn(h1, params["s1"], params["b1"]), 0.0)
    wdw_oihw = params["wdw"].transpose(2, 0, 1).reshape(planes, 1, 3, 3)
    h2 = jax.lax.conv_general_dilated(
        h1, wdw_oihw, (stride, stride), ((1, 1), (1, 1)),
        dimension_numbers=("NCHW", "OIHW", "NCHW"),
        feature_group_count=planes, precision=jax.lax.Precision.HIGHEST)
    h2 = jnp.maximum(bn(h2, params["s2"], params["b2"]), 0.0)
    h3 = jnp.einsum("nchw,cf->nfhw", h2, params["w3"], precision="highest")
    h3 = bn(h3, params["s3"], params["b3"])
    if stride == 1:
        if cin != cout:
            sc = jnp.einsum("nchw,cf->nfhw", x, params["wsc"],
                            precision="highest")
            sc = bn(sc, params["ssc"], params["bsc"])
        else:
            sc = x
        h3 = h3 + sc
    return h3


def _folded_bn(kgamma, kbeta, kmean, kvar, c):
    gamma = 1.0 + 0.1 * jax.random.normal(kgamma, (c,), jnp.float32)
    beta = 0.1 * jax.random.normal(kbeta, (c,), jnp.float32)
    mean = 0.1 * jax.random.normal(kmean, (c,), jnp.float32)
    var = 1.0 + 0.1 * jax.random.uniform(kvar, (c,), jnp.float32)
    scale = gamma * jax.lax.rsqrt(var + BN_EPS)
    bias = beta - mean * scale
    return scale.reshape(1, c), bias.reshape(1, c)


def _make_params(key, cin, planes, cout):
    ks = jax.random.split(key, 20)
    p = {}
    p["w1"] = 0.2 * jax.random.normal(ks[0], (cin, planes), jnp.float32)
    p["wdw"] = 0.2 * jax.random.normal(ks[1], (3, 3, planes), jnp.float32)
    p["w3"] = 0.2 * jax.random.normal(ks[2], (planes, cout), jnp.float32)
    p["wsc"] = 0.2 * jax.random.normal(ks[3], (cin, cout), jnp.float32)
    p["s1"], p["b1"] = _folded_bn(ks[4], ks[5], ks[6], ks[7], planes)
    p["s2"], p["b2"] = _folded_bn(ks[8], ks[9], ks[10], ks[11], planes)
    p["s3"], p["b3"] = _folded_bn(ks[12], ks[13], ks[14], ks[15], cout)
    p["ssc"], p["bsc"] = _folded_bn(ks[16], ks[17], ks[18], ks[19], cout)
    return p


if __name__ == "__main__":
    # Small NCHW shapes consistent with the module: (2, 4, 16, 16).
    N, Cin, H, W = 2, 4, 16, 16
    expansion = 6
    planes = expansion * Cin

    key = jax.random.PRNGKey(0)
    kx, kp1, kp2, kp3 = jax.random.split(key, 4)
    x = jax.random.normal(kx, (N, Cin, H, W), jnp.float32)

    # (cout, stride): conv-shortcut, identity-shortcut, strided (no shortcut).
    for (cout, stride), kp in zip([(8, 1), (Cin, 1), (8, 2)], [kp1, kp2, kp3]):
        params = _make_params(kp, Cin, planes, cout)
        out = jax.block_until_ready(block_forward(x, params, stride))
        ref = jax.block_until_ready(reference_block(x, params, stride))
        ho = (H - 1) // stride + 1
        wo = (W - 1) // stride + 1
        assert out.shape == ref.shape == (N, cout, ho, wo), out.shape
        # Kernel matmuls run at default MXU precision (bf16 passes, f32
        # accumulation); the reference runs at highest precision, so the
        # tolerance reflects bf16-class rounding on O(1) values.
        assert jnp.allclose(out, ref, atol=2e-2, rtol=2e-2), float(
            jnp.max(jnp.abs(out - ref)))
    print("KERNEL_OK")
</pallas_src>

<mosaic_0001>
module attributes {stable_mosaic.version = 11 : i64} {
  func.func @_block_kernel(%arg0: i32, %arg1: i32, %arg2: memref<1x1x5x456xf32, #tpu.memory_space<vmem>>, %arg3: memref<24x5xf32, #tpu.memory_space<vmem>>, %arg4: memref<24x9xf32, #tpu.memory_space<vmem>>, %arg5: memref<24x1xf32, #tpu.memory_space<vmem>>, %arg6: memref<8x24xf32, #tpu.memory_space<vmem>>, %arg7: memref<8x1xf32, #tpu.memory_space<vmem>>, %arg8: memref<8x5xf32, #tpu.memory_space<vmem>>, %arg9: memref<1x1x8x384xf32, #tpu.memory_space<vmem>>) attributes {dimension_semantics = [#tpu.dimension_semantics<parallel>, #tpu.dimension_semantics<parallel>], iteration_bounds = array<i64: 2, 1>, scalar_prefetch = 0 : i64, scratch_operands = 0 : i64, tpu.core_type = #tpu.core_type<tc>, window_params = [{transform_indices = @transform_0, window_bounds = array<i64: 1, 1, 5, 456>}, {pipeline_mode = #tpu.pipeline_mode<synchronous>, transform_indices = @transform_1, window_bounds = array<i64: 24, 5>}, {pipeline_mode = #tpu.pipeline_mode<synchronous>, transform_indices = @transform_2, window_bounds = array<i64: 24, 9>}, {pipeline_mode = #tpu.pipeline_mode<synchronous>, transform_indices = @transform_3, window_bounds = array<i64: 24, 1>}, {pipeline_mode = #tpu.pipeline_mode<synchronous>, transform_indices = @transform_4, window_bounds = array<i64: 8, 24>}, {pipeline_mode = #tpu.pipeline_mode<synchronous>, transform_indices = @transform_5, window_bounds = array<i64: 8, 1>}, {pipeline_mode = #tpu.pipeline_mode<synchronous>, transform_indices = @transform_6, window_bounds = array<i64: 8, 5>}, {transform_indices = @transform_7, window_bounds = array<i64: 1, 1, 8, 384>}]} {
    %c0 = arith.constant 0 : index
    %c0_0 = arith.constant 0 : index
    %c0_1 = arith.constant 0 : index
    %c0_2 = arith.constant 0 : index
    %0 = vector.load %arg2[%c0, %c0_0, %c0_1, %c0_2] : memref<1x1x5x456xf32, #tpu.memory_space<vmem>>, vector<1x1x5x456xf32>
    %1 = vector.shape_cast %0 : vector<1x1x5x456xf32> to vector<5x456xf32>
    %c0_3 = arith.constant 0 : index
    %c0_4 = arith.constant 0 : index
    %2 = vector.load %arg3[%c0_3, %c0_4] : memref<24x5xf32, #tpu.memory_space<vmem>>, vector<24x5xf32>
    %cst = arith.constant dense<0.000000e+00> : vector<24x456xf32>
    %3 = tpu.matmul %2, %1, %cst {dimension_numbers = #tpu.dot_dimension_numbers<[1], [0], [0], [1], [0, 0, 1, 1], [], []>} : vector<24x5xf32>, vector<5x456xf32>, vector<24x456xf32> -> vector<24x456xf32>
    %cst_5 = arith.constant 0.000000e+00 : f32
    %4 = vector.broadcast %cst_5 : f32 to vector<24x456xf32>
    %5 = arith.maximumf %3, %4 : vector<24x456xf32>
    %c0_6 = arith.constant 0 : index
    %c0_7 = arith.constant 0 : index
    %6 = vector.load %arg4[%c0_6, %c0_7] : memref<24x9xf32, #tpu.memory_space<vmem>>, vector<24x9xf32>
    %7 = vector.extract_strided_slice %5 {offsets = [0, 0], sizes = [24, 384], strides = [1, 1]} : vector<24x456xf32> to vector<24x384xf32>
    %8 = vector.extract_strided_slice %6 {offsets = [0, 0], sizes = [24, 1], strides = [1, 1]} : vector<24x9xf32> to vector<24x1xf32>
    %9 = vector.broadcast %8 : vector<24x1xf32> to vector<24x384xf32>
    %10 = arith.mulf %7, %9 : vector<24x384xf32>
    %11 = vector.extract_strided_slice %5 {offsets = [0, 1], sizes = [24, 384], strides = [1, 1]} : vector<24x456xf32> to vector<24x384xf32>
    %12 = vector.extract_strided_slice %6 {offsets = [0, 1], sizes = [24, 1], strides = [1, 1]} : vector<24x9xf32> to vector<24x1xf32>
    %13 = vector.broadcast %12 : vector<24x1xf32> to vector<24x384xf32>
    %14 = arith.mulf %11, %13 : vector<24x384xf32>
    %15 = arith.addf %10, %14 : vector<24x384xf32>
    %16 = vector.extract_strided_slice %5 {offsets = [0, 2], sizes = [24, 384], strides = [1, 1]} : vector<24x456xf32> to vector<24x384xf32>
    %17 = vector.extract_strided_slice %6 {offsets = [0, 2], sizes = [24, 1], strides = [1, 1]} : vector<24x9xf32> to vector<24x1xf32>
    %18 = vector.broadcast %17 : vector<24x1xf32> to vector<24x384xf32>
    %19 = arith.mulf %16, %18 : vector<24x384xf32>
    %20 = arith.addf %15, %19 : vector<24x384xf32>
    %21 = vector.extract_strided_slice %5 {offsets = [0, 24], sizes = [24, 384], strides = [1, 1]} : vector<24x456xf32> to vector<24x384xf32>
    %22 = vector.extract_strided_slice %6 {offsets = [0, 3], sizes = [24, 1], strides = [1, 1]} : vector<24x9xf32> to vector<24x1xf32>
    %23 = vector.broadcast %22 : vector<24x1xf32> to vector<24x384xf32>
    %24 = arith.mulf %21, %23 : vector<24x384xf32>
    %25 = arith.addf %20, %24 : vector<24x384xf32>
    %26 = vector.extract_strided_slice %5 {offsets = [0, 25], sizes = [24, 384], strides = [1, 1]} : vector<24x456xf32> to vector<24x384xf32>
    %27 = vector.extract_strided_slice %6 {offsets = [0, 4], sizes = [24, 1], strides = [1, 1]} : vector<24x9xf32> to vector<24x1xf32>
    %28 = vector.broadcast %27 : vector<24x1xf32> to vector<24x384xf32>
    %29 = arith.mulf %26, %28 : vector<24x384xf32>
    %30 = arith.addf %25, %29 : vector<24x384xf32>
    %31 = vector.extract_strided_slice %5 {offsets = [0, 26], sizes = [24, 384], strides = [1, 1]} : vector<24x456xf32> to vector<24x384xf32>
    %32 = vector.extract_strided_slice %6 {offsets = [0, 5], sizes = [24, 1], strides = [1, 1]} : vector<24x9xf32> to vector<24x1xf32>
    %33 = vector.broadcast %32 : vector<24x1xf32> to vector<24x384xf32>
    %34 = arith.mulf %31, %33 : vector<24x384xf32>
    %35 = arith.addf %30, %34 : vector<24x384xf32>
    %36 = vector.extract_strided_slice %5 {offsets = [0, 48], sizes = [24, 384], strides = [1, 1]} : vector<24x456xf32> to vector<24x384xf32>
    %37 = vector.extract_strided_slice %6 {offsets = [0, 6], sizes = [24, 1], strides = [1, 1]} : vector<24x9xf32> to vector<24x1xf32>
    %38 = vector.broadcast %37 : vector<24x1xf32> to vector<24x384xf32>
    %39 = arith.mulf %36, %38 : vector<24x384xf32>
    %40 = arith.addf %35, %39 : vector<24x384xf32>
    %41 = vector.extract_strided_slice %5 {offsets = [0, 49], sizes = [24, 384], strides = [1, 1]} : vector<24x456xf32> to vector<24x384xf32>
    %42 = vector.extract_strided_slice %6 {offsets = [0, 7], sizes = [24, 1], strides = [1, 1]} : vector<24x9xf32> to vector<24x1xf32>
    %43 = vector.broadcast %42 : vector<24x1xf32> to vector<24x384xf32>
    %44 = arith.mulf %41, %43 : vector<24x384xf32>
    %45 = arith.addf %40, %44 : vector<24x384xf32>
    %46 = vector.extract_strided_slice %5 {offsets = [0, 50], sizes = [24, 384], strides = [1, 1]} : vector<24x456xf32> to vector<24x384xf32>
    %47 = vector.extract_strided_slice %6 {offsets = [0, 8], sizes = [24, 1], strides = [1, 1]} : vector<24x9xf32> to vector<24x1xf32>
    %48 = vector.broadcast %47 : vector<24x1xf32> to vector<24x384xf32>
    %49 = arith.mulf %46, %48 : vector<24x384xf32>
    %50 = arith.addf %45, %49 : vector<24x384xf32>
    %c0_8 = arith.constant 0 : index
    %c0_9 = arith.constant 0 : index
    %51 = vector.load %arg5[%c0_8, %c0_9] : memref<24x1xf32, #tpu.memory_space<vmem>>, vector<24x1xf32>
    %52 = vector.broadcast %51 : vector<24x1xf32> to vector<24x384xf32>
    %53 = arith.addf %50, %52 : vector<24x384xf32>
    %cst_10 = arith.constant 0.000000e+00 : f32
    %54 = vector.broadcast %cst_10 : f32 to vector<24x384xf32>
    %55 = arith.maximumf %53, %54 : vector<24x384xf32>
    %c0_11 = arith.constant 0 : index
    %c0_12 = arith.constant 0 : index
    %56 = vector.load %arg6[%c0_11, %c0_12] : memref<8x24xf32, #tpu.memory_space<vmem>>, vector<8x24xf32>
    %cst_13 = arith.constant dense<0.000000e+00> : vector<8x384xf32>
    %57 = tpu.matmul %56, %55, %cst_13 {dimension_numbers = #tpu.dot_dimension_numbers<[1], [0], [0], [1], [0, 0, 1, 1], [], []>} : vector<8x24xf32>, vector<24x384xf32>, vector<8x384xf32> -> vector<8x384xf32>
    %c0_14 = arith.constant 0 : index
    %c0_15 = arith.constant 0 : index
    %58 = vector.load %arg7[%c0_14, %c0_15] : memref<8x1xf32, #tpu.memory_space<vmem>>, vector<8x1xf32>
    %59 = vector.broadcast %58 : vector<8x1xf32> to vector<8x384xf32>
    %60 = arith.addf %57, %59 : vector<8x384xf32>
    %c0_16 = arith.constant 0 : index
    %c0_17 = arith.constant 0 : index
    %61 = vector.load %arg8[%c0_16, %c0_17] : memref<8x5xf32, #tpu.memory_space<vmem>>, vector<8x5xf32>
    %62 = vector.extract_strided_slice %1 {offsets = [0, 25], sizes = [5, 384], strides = [1, 1]} : vector<5x456xf32> to vector<5x384xf32>
    %cst_18 = arith.constant dense<0.000000e+00> : vector<8x384xf32>
    %63 = tpu.matmul %61, %62, %cst_18 {dimension_numbers = #tpu.dot_dimension_numbers<[1], [0], [0], [1], [0, 0, 1, 1], [], []>} : vector<8x5xf32>, vector<5x384xf32>, vector<8x384xf32> -> vector<8x384xf32>
    %64 = arith.addf %60, %63 : vector<8x384xf32>
    %c0_19 = arith.constant 0 : index
    %c0_20 = arith.constant 0 : index
    %c0_21 = arith.constant 0 : index
    %c0_22 = arith.constant 0 : index
    %65 = vector.load %arg9[%c0_19, %c0_20, %c0_21, %c0_22] : memref<1x1x8x384xf32, #tpu.memory_space<vmem>>, vector<1x1x8x384xf32>
    %66 = vector.shape_cast %65 : vector<1x1x8x384xf32> to vector<8x384xf32>
    %67 = vector.shape_cast %64 : vector<8x384xf32> to vector<1x1x8x384xf32>
    tpu.vector_store %arg9[%c0_19, %c0_20, %c0_21, %c0_22], %67 {strides = array<i32>} : memref<1x1x8x384xf32, #tpu.memory_space<vmem>>, vector<1x1x8x384xf32>,
    return
  }
  func.func @transform_0(%arg0: i32, %arg1: i32) -> (i32, i32, i32, i32) {
    %c0_i32 = arith.constant 0 : i32
    %c0_i32_0 = arith.constant 0 : i32
    %c0_i32_1 = arith.constant 0 : i32
    return %arg0, %arg1, %c0_i32, %c0_i32_0 : i32, i32, i32, i32
  }
  func.func @transform_1(%arg0: i32, %arg1: i32) -> (i32, i32) {
    %c0_i32 = arith.constant 0 : i32
    %c0_i32_0 = arith.constant 0 : i32
    %c0_i32_1 = arith.constant 0 : i32
    return %c0_i32, %c0_i32_0 : i32, i32
  }
  func.func @transform_2(%arg0: i32, %arg1: i32) -> (i32, i32) {
    %c0_i32 = arith.constant 0 : i32
    %c0_i32_0 = arith.constant 0 : i32
    %c0_i32_1 = arith.constant 0 : i32
    return %c0_i32, %c0_i32_0 : i32, i32
  }
  func.func @transform_3(%arg0: i32, %arg1: i32) -> (i32, i32) {
    %c0_i32 = arith.constant 0 : i32
    %c0_i32_0 = arith.constant 0 : i32
    %c0_i32_1 = arith.constant 0 : i32
    return %c0_i32, %c0_i32_0 : i32, i32
  }
  func.func @transform_4(%arg0: i32, %arg1: i32) -> (i32, i32) {
    %c0_i32 = arith.constant 0 : i32
    %c0_i32_0 = arith.constant 0 : i32
    %c0_i32_1 = arith.constant 0 : i32
    return %c0_i32, %c0_i32_0 : i32, i32
  }
  func.func @transform_5(%arg0: i32, %arg1: i32) -> (i32, i32) {
    %c0_i32 = arith.constant 0 : i32
    %c0_i32_0 = arith.constant 0 : i32
    %c0_i32_1 = arith.constant 0 : i32
    return %c0_i32, %c0_i32_0 : i32, i32
  }
  func.func @transform_6(%arg0: i32, %arg1: i32) -> (i32, i32) {
    %c0_i32 = arith.constant 0 : i32
    %c0_i32_0 = arith.constant 0 : i32
    %c0_i32_1 = arith.constant 0 : i32
    return %c0_i32, %c0_i32_0 : i32, i32
  }
  func.func @transform_7(%arg0: i32, %arg1: i32) -> (i32, i32, i32, i32) {
    %c0_i32 = arith.constant 0 : i32
    %c0_i32_0 = arith.constant 0 : i32
    %c0_i32_1 = arith.constant 0 : i32
    return %arg0, %arg1, %c0_i32, %c0_i32_0 : i32, i32, i32, i32
  }
}

</mosaic_0001>

<llo_original>
// kernel: tpu_custom_call.1
$region0: #{tpu_custom_call.1}
  #allocation0 [shape = 'u32[]', space=smem, size = 0x4, offset = 0x4, fixed_abs, tag = 'smem constant byte address 0x4 - core index']
  #allocation1 [shape = 'u32[72,128]{1,0:T(1,128)}', space=vmem, size = 0x9000, scoped, tag = 'internal scratch']
  %s0 = inlined_call_operand.vmem [shape: f32[2,1,5,456], index: 0, kind: input, shape index: {}]
  %s1 = inlined_call_operand.vmem [shape: f32[24,5], index: 1, kind: input, shape index: {}]
  %s2 = inlined_call_operand.vmem [shape: f32[24,9], index: 2, kind: input, shape index: {}]
  %s3 = inlined_call_operand.vmem [shape: f32[24,1], index: 3, kind: input, shape index: {}]
  %s4 = inlined_call_operand.vmem [shape: f32[8,24], index: 4, kind: input, shape index: {}]
  %s5 = inlined_call_operand.vmem [shape: f32[8,1], index: 5, kind: input, shape index: {}]
  %s6 = inlined_call_operand.vmem [shape: f32[8,5], index: 6, kind: input, shape index: {}]
  %s7 = inlined_call_operand.hbm [shape: f32[2,1,8,384], index: 7, kind: output, shape index: {}]
  %s8 = sld [smem:[#allocation0]]
  $region61: #{tpu_custom_call.1} parent=0
    _
  %s10 = ssub.s32 1, %s8
  %s11 = scalar_select 0, %s10, %s8
  $region1: #{tpu_custom_call.1} parent=0
    #allocation2 [shape = 'u8[24576]{0}', space=vmem, size = 0x6000, scoped, tag = 'output window, operand 0']
    #allocation3 [shape = 's32[2]{0}', space=sflag, size = 0x8, scoped, tag = 'scoped memory for tpu_custom_call.1']
    %12 = vsyncpa [#allocation3], 0
    %s13 = scalar_lea.sflag [#allocation3], 1
    %14 = vsyncpa %s13, 0
    loop: start=0, step=1, limit=4
    $region2: #{tpu_custom_call.1} parent=1 // loop_pre_header
      _
    $region3: #{tpu_custom_call.1} parent=1 // loop_header
      %s16 = sphi 0, %s20
      %p17 = scmp.ge.s32.totalorder %s16, 4
      %s23 = sphi 0, %s35
      %s24 = sphi 0, %s31
      %s25 = sphi 0, %s23
      %s26 = sphi 0, %s24
      %s27 = sphi 0, %s25
      %s28 = sphi 0, %s26
      %s40 = sphi 0, %s42
      %s43 = sphi 0, %s40
      %s44 = sphi 0, %s43
      %s60 = sphi 0, %s44
      %s64 = sphi 0, %s64
      %s66 = sphi 0, %s64
      %s67 = sphi 0, %s66
      %s81 = sphi 0, %s67
      %s85 = sphi 0, %s85
      %s87 = sphi 0, %s85
      %s88 = sphi 0, %s87
      %s102 = sphi 0, %s88
      %s106 = sphi 0, %s106
      %s108 = sphi 0, %s106
      %s109 = sphi 0, %s108
      %s123 = sphi 0, %s109
      %s127 = sphi 0, %s127
      %s129 = sphi 0, %s127
      %s130 = sphi 0, %s129
      %s144 = sphi 0, %s130
      %s148 = sphi 0, %s148
      %s150 = sphi 0, %s148
      %s151 = sphi 0, %s150
      %s165 = sphi 0, %s151
      %s169 = sphi 0, %s169
      %s171 = sphi 0, %s169
      %s172 = sphi 0, %s171
      %s186 = sphi 0, %s172
      %s194 = sphi 0, %s196
      %s197 = sphi 0, %s194
      %s198 = sphi 0, %s197
      %s214 = sphi 0, %s198
    $region4: #{tpu_custom_call.1} parent=1 // loop_header_branch
      %19 = sbr.rel (%p17) target = $region8
    $region5: #{tpu_custom_call.1} parent=1 // loop_body
      %s21 = ssub.s32 %s16, 1
      %s22 = ssub.s32 %s16, 2
      %s29 = sadd.s32 1, %s24
      %p30 = scmp.ge.s32.totalorder %s29, 1
      %s31 = scalar_select %p30, 0, %s29
      %s32 = sadd.s32 1, %s23
      %s33 = scalar_select %p30, %s32, %s23
      %p34 = scmp.ge.s32.totalorder %s33, 2
      %s35 = scalar_select %p34, 0, %s33
      %s36 = ssub.s32 %s23, %s35
      %s37 = ssub.s32 %s24, %s31
      %s38 = sor.u32 %s36, %s37
      %p39 = scmp.eq.s32.totalorder %s38, 0
      %s41 = sadd.s32 %s40, 1
      %s42 = scalar_select %p39, %s40, %s41
      %p45 = pneg %p39
      %p46 = scmp.eq.s32.totalorder %s16, 1
      %p47 = por %p45, %p46
      %p48 = scmp.ne.s32.totalorder %s40, %s43
      %p49 = scmp.eq.s32.totalorder %s16, 0
      %p50 = por %p48, %p49
      %p51 = scmp.ne.s32.totalorder %s40, %s43
      %p52 = scmp.eq.s32.totalorder %s21, 1
      %p53 = por %p51, %p52
      %p54 = scmp.ne.s32.totalorder %s43, %s44
      %p55 = scmp.eq.s32.totalorder %s21, 0
      %p56 = por %p54, %p55
      %p57 = scmp.ne.s32.totalorder %s43, %s44
      %p58 = scmp.eq.s32.totalorder %s22, 1
      %p59 = por %p57, %p58
      %p61 = scmp.ne.s32.totalorder %s44, %s60
      %p62 = scmp.eq.s32.totalorder %s22, 0
      %p63 = por %p61, %p62
      %s65 = sadd.s32 %s64, 1
      %p68 = scmp.eq.s32.totalorder %s16, 1
      %p69 = scmp.ne.s32.totalorder %s64, %s66
      %p70 = scmp.eq.s32.totalorder %s16, 0
      %p71 = por %p69, %p70
      %p72 = scmp.ne.s32.totalorder %s64, %s66
      %p73 = scmp.eq.s32.totalorder %s21, 1
      %p74 = por %p72, %p73
      %p75 = scmp.ne.s32.totalorder %s66, %s67
      %p76 = scmp.eq.s32.totalorder %s21, 0
      %p77 = por %p75, %p76
      %p78 = scmp.ne.s32.totalorder %s66, %s67
      %p79 = scmp.eq.s32.totalorder %s22, 1
      %p80 = por %p78, %p79
      %p82 = scmp.ne.s32.totalorder %s67, %s81
      %p83 = scmp.eq.s32.totalorder %s22, 0
      %p84 = por %p82, %p83
      %s86 = sadd.s32 %s85, 1
      %p89 = scmp.eq.s32.totalorder %s16, 1
      %p90 = scmp.ne.s32.totalorder %s85, %s87
      %p91 = scmp.eq.s32.totalorder %s16, 0
      %p92 = por %p90, %p91
      %p93 = scmp.ne.s32.totalorder %s85, %s87
      %p94 = scmp.eq.s32.totalorder %s21, 1
      %p95 = por %p93, %p94
      %p96 = scmp.ne.s32.totalorder %s87, %s88
      %p97 = scmp.eq.s32.totalorder %s21, 0
      %p98 = por %p96, %p97
      %p99 = scmp.ne.s32.totalorder %s87, %s88
      %p100 = scmp.eq.s32.totalorder %s22, 1
      %p101 = por %p99, %p100
      %p103 = scmp.ne.s32.totalorder %s88, %s102
      %p104 = scmp.eq.s32.totalorder %s22, 0
      %p105 = por %p103, %p104
      %s107 = sadd.s32 %s106, 1
      %p110 = scmp.eq.s32.totalorder %s16, 1
      %p111 = scmp.ne.s32.totalorder %s106, %s108
      %p112 = scmp.eq.s32.totalorder %s16, 0
      %p113 = por %p111, %p112
      %p114 = scmp.ne.s32.totalorder %s106, %s108
      %p115 = scmp.eq.s32.totalorder %s21, 1
      %p116 = por %p114, %p115
      %p117 = scmp.ne.s32.totalorder %s108, %s109
      %p118 = scmp.eq.s32.totalorder %s21, 0
      %p119 = por %p117, %p118
      %p120 = scmp.ne.s32.totalorder %s108, %s109
      %p121 = scmp.eq.s32.totalorder %s22, 1
      %p122 = por %p120, %p121
      %p124 = scmp.ne.s32.totalorder %s109, %s123
      %p125 = scmp.eq.s32.totalorder %s22, 0
      %p126 = por %p124, %p125
      %s128 = sadd.s32 %s127, 1
      %p131 = scmp.eq.s32.totalorder %s16, 1
      %p132 = scmp.ne.s32.totalorder %s127, %s129
      %p133 = scmp.eq.s32.totalorder %s16, 0
      %p134 = por %p132, %p133
      %p135 = scmp.ne.s32.totalorder %s127, %s129
      %p136 = scmp.eq.s32.totalorder %s21, 1
      %p137 = por %p135, %p136
      %p138 = scmp.ne.s32.totalorder %s129, %s130
      %p139 = scmp.eq.s32.totalorder %s21, 0
      %p140 = por %p138, %p139
      %p141 = scmp.ne.s32.totalorder %s129, %s130
      %p142 = scmp.eq.s32.totalorder %s22, 1
      %p143 = por %p141, %p142
      %p145 = scmp.ne.s32.totalorder %s130, %s144
      %p146 = scmp.eq.s32.totalorder %s22, 0
      %p147 = por %p145, %p146
      %s149 = sadd.s32 %s148, 1
      %p152 = scmp.eq.s32.totalorder %s16, 1
      %p153 = scmp.ne.s32.totalorder %s148, %s150
      %p154 = scmp.eq.s32.totalorder %s16, 0
      %p155 = por %p153, %p154
      %p156 = scmp.ne.s32.totalorder %s148, %s150
      %p157 = scmp.eq.s32.totalorder %s21, 1
      %p158 = por %p156, %p157
      %p159 = scmp.ne.s32.totalorder %s150, %s151
      %p160 = scmp.eq.s32.totalorder %s21, 0
      %p161 = por %p159, %p160
      %p162 = scmp.ne.s32.totalorder %s150, %s151
      %p163 = scmp.eq.s32.totalorder %s22, 1
      %p164 = por %p162, %p163
      %p166 = scmp.ne.s32.totalorder %s151, %s165
      %p167 = scmp.eq.s32.totalorder %s22, 0
      %p168 = por %p166, %p167
      %s170 = sadd.s32 %s169, 1
      %p173 = scmp.eq.s32.totalorder %s16, 1
      %p174 = scmp.ne.s32.totalorder %s169, %s171
      %p175 = scmp.eq.s32.totalorder %s16, 0
      %p176 = por %p174, %p175
      %p177 = scmp.ne.s32.totalorder %s169, %s171
      %p178 = scmp.eq.s32.totalorder %s21, 1
      %p179 = por %p177, %p178
      %p180 = scmp.ne.s32.totalorder %s171, %s172
      %p181 = scmp.eq.s32.totalorder %s21, 0
      %p182 = por %p180, %p181
      %p183 = scmp.ne.s32.totalorder %s171, %s172
      %p184 = scmp.eq.s32.totalorder %s22, 1
      %p185 = por %p183, %p184
      %p187 = scmp.ne.s32.totalorder %s172, %s186
      %p188 = scmp.eq.s32.totalorder %s22, 0
      %p189 = por %p187, %p188
      %s190 = ssub.s32 %s23, %s35
      %s191 = ssub.s32 %s24, %s31
      %s192 = sor.u32 %s190, %s191
      %p193 = scmp.eq.s32.totalorder %s192, 0
      %s195 = sadd.s32 %s194, 1
      %s196 = scalar_select %p193, %s194, %s195
      %p199 = pneg %p193
      %p200 = scmp.eq.s32.totalorder %s16, 1
      %p201 = por %p199, %p200
      %p202 = scmp.ne.s32.totalorder %s194, %s197
      %p203 = scmp.eq.s32.totalorder %s16, 0
      %p204 = por %p202, %p203
      %p205 = scmp.ne.s32.totalorder %s194, %s197
      %p206 = scmp.eq.s32.totalorder %s21, 1
      %p207 = por %p205, %p206
      %p208 = scmp.ne.s32.totalorder %s197, %s198
      %p209 = scmp.eq.s32.totalorder %s21, 0
      %p210 = por %p208, %p209
      %p211 = scmp.ne.s32.totalorder %s197, %s198
      %p212 = scmp.eq.s32.totalorder %s22, 1
      %p213 = por %p211, %p212
      %p215 = scmp.ne.s32.totalorder %s198, %s214
      %p216 = scmp.eq.s32.totalorder %s22, 0
      %p217 = por %p215, %p216
      %p218 = scmp.le.s32.totalorder 1, %s16
      %p219 = scmp.lt.s32.totalorder %s16, 3
      %p220 = pnand %p218, %p219
      %p221 = pneg %p220
      // Predicated region
      $region9: #{tpu_custom_call.1} parent=5 // pred_check
        _
      $region10: #{tpu_custom_call.1} parent=5 // pred_check_branch
        %223 = sbr.rel (%p220) target = $region12
      $region11: #{tpu_custom_call.1} parent=5 // pred_region
        %s224 = ssub.s32 %s16, 1
        // Predicated region
        $region13: #{tpu_custom_call.1} parent=11 // pred_check
          %p225 = pneg %p77
        $region14: #{tpu_custom_call.1} parent=11 // pred_check_branch
          %227 = sbr.rel (%p225) target = $region16
        $region15: #{tpu_custom_call.1} parent=11 // pred_region
          _
        $region16: #{tpu_custom_call.1} parent=11 // pred_fallthru
          _
        // Predicated region
        $region17: #{tpu_custom_call.1} parent=11 // pred_check
          %p228 = pneg %p98
        $region18: #{tpu_custom_call.1} parent=11 // pred_check_branch
          %230 = sbr.rel (%p228) target = $region20
        $region19: #{tpu_custom_call.1} parent=11 // pred_region
          _
        $region20: #{tpu_custom_call.1} parent=11 // pred_fallthru
          _
        // Predicated region
        $region21: #{tpu_custom_call.1} parent=11 // pred_check
          %p231 = pneg %p119
        $region22: #{tpu_custom_call.1} parent=11 // pred_check_branch
          %233 = sbr.rel (%p231) target = $region24
        $region23: #{tpu_custom_call.1} parent=11 // pred_region
          _
        $region24: #{tpu_custom_call.1} parent=11 // pred_fallthru
          _
        // Predicated region
        $region25: #{tpu_custom_call.1} parent=11 // pred_check
          %p234 = pneg %p140
        $region26: #{tpu_custom_call.1} parent=11 // pred_check_branch
          %236 = sbr.rel (%p234) target = $region28
        $region27: #{tpu_custom_call.1} parent=11 // pred_region
          _
        $region28: #{tpu_custom_call.1} parent=11 // pred_fallthru
          _
        // Predicated region
        $region29: #{tpu_custom_call.1} parent=11 // pred_check
          %p237 = pneg %p161
        $region30: #{tpu_custom_call.1} parent=11 // pred_check_branch
          %239 = sbr.rel (%p237) target = $region32
        $region31: #{tpu_custom_call.1} parent=11 // pred_region
          _
        $region32: #{tpu_custom_call.1} parent=11 // pred_fallthru
          _
        // Predicated region
        $region33: #{tpu_custom_call.1} parent=11 // pred_check
          %p240 = pneg %p182
        $region34: #{tpu_custom_call.1} parent=11 // pred_check_branch
          %242 = sbr.rel (%p240) target = $region36
        $region35: #{tpu_custom_call.1} parent=11 // pred_region
          _
        $region36: #{tpu_custom_call.1} parent=11 // pred_fallthru
          _
      $region12: #{tpu_custom_call.1} parent=5 // pred_fallthru
        _
      %p243 = scmp.lt.s32.totalorder %s16, 2
      // Predicated region
      $region37: #{tpu_custom_call.1} parent=5 // pred_check
        %p244 = pneg %p243
      $region38: #{tpu_custom_call.1} parent=5 // pred_check_branch
        %246 = sbr.rel (%p244) target = $region40
      $region39: #{tpu_custom_call.1} parent=5 // pred_region
        // Predicated region
        $region41: #{tpu_custom_call.1} parent=39 // pred_check
          %p247 = pneg %p50
        $region42: #{tpu_custom_call.1} parent=39 // pred_check_branch
          %249 = sbr.rel (%p247) target = $region44
        $region43: #{tpu_custom_call.1} parent=39 // pred_region
          %p250 = scmp.lt.s32.totalorder %s23, 1
          %s251 = scalar_select %p250, %s23, 1
          %p252 = scmp.lt.s32.totalorder %s24, 0
          %s253 = scalar_select %p252, %s24, 0
          %s254 = smul.addr %s253, 4
          %s255 = smul.addr %s251, 4
          %s256 = sadd.s32 %s254, %s255
          %s257 = smul.addr %s256, 8
          %s258 = scalar_lea.vmem %s0, %s257
        $region44: #{tpu_custom_call.1} parent=39 // pred_fallthru
          _
      $region40: #{tpu_custom_call.1} parent=5 // pred_fallthru
        _
      %p259 = scmp.le.s32.totalorder 1, %s16
      %p260 = scmp.lt.s32.totalorder %s16, 3
      %p261 = pnand %p259, %p260
      %p262 = pneg %p261
      // Predicated region
      $region45: #{tpu_custom_call.1} parent=5 // pred_check
        _
      $region46: #{tpu_custom_call.1} parent=5 // pred_check_branch
        %264 = sbr.rel (%p261) target = $region48
      $region47: #{tpu_custom_call.1} parent=5 // pred_region
        %s265 = ssub.s32 %s16, 1
        %p266 = scmp.lt.s32.totalorder %s25, 1
        %s267 = scalar_select %p266, %s25, 1
        %p268 = scmp.lt.s32.totalorder %s26, 0
        %s269 = scalar_select %p268, %s26, 0
        %s270 = smul.addr %s269, 4
        %s271 = smul.addr %s267, 4
        %s272 = sadd.s32 %s270, %s271
        %s273 = smul.addr %s272, 8
        %s274 = scalar_lea.vmem %s0, %s273
        %p275 = pneg %p56
        %p276 = pneg %p53
        %p277 = pneg %p77
        %p278 = pneg %p74
        %p279 = pneg %p98
        %p280 = pneg %p95
        %p281 = pneg %p119
        %p282 = pneg %p116
        %p283 = pneg %p140
        %p284 = pneg %p137
        %p285 = pneg %p161
        %p286 = pneg %p158
        %p287 = pneg %p182
        %p288 = pneg %p179
        %p289 = pneg %p210
        %p290 = pneg %p207
        %s291 = sand.u32 %s197, 1
        %s292 = scalar_lea.sflag [#allocation3], %s291
        %s293 = sand.u32 %s197, 1
        %s294 = smul.addr %s293, 24
        %s295 = scalar_lea.vmem [#allocation2], %s294
        %p296 = scmp.lt.s32.totalorder %s25, 1
        %s297 = scalar_select %p296, %s25, 1
        %p298 = scmp.lt.s32.totalorder %s26, 0
        %s299 = scalar_select %p298, %s26, 0
        %s300 = smul.addr %s299, 4
        %s301 = smul.addr %s297, 4
        %s302 = sadd.s32 %s300, %s301
        %s303 = smul.addr %s302, 8
        %s304 = scalar_lea.vmem %s0, %s303
        %v305 = vld [vmem:[%s304] sm:$0x1f]
        %v306 = vld [vmem:[%s304 + $0x8] sm:$0x1f]
        %v307 = vld [vmem:[%s304 + $0x10] sm:$0x1f]
        %v308 = vld [vmem:[%s304 + $0x18] sm:$0x1f]
        %v309 = vld [vmem:[%s1] sm:$0xff]
        %v310 = vld [vmem:[%s1 + $0x8] sm:$0xff]
        %v311 = vld [vmem:[%s1 + $0x10] sm:$0xff]
        %vm312 = vcmask 39936
        %v314 = vsel %vm312, %v309, 0
        %v317 = vsel %vm312, %v310, 0
        %v320 = vsel %vm312, %v311, 0
        %vm322 = vcmask 1044480
        %v324 = vsel %vm322, %v305, 0
        %v327 = vsel %vm322, %v306, 0
        %v330 = vsel %vm322, %v307, 0
        %v333 = vsel %vm322, %v308, 0
        %335 = vmatpush.msra.mxu0 0.0
        %336 = vmatpush.msra.mxu0 0.0
        %337 = vmatpush.msra.mxu0 0.0
        %338 = vmatpush.msra.mxu0 0.0
        %339 = vmatpush.msra.mxu0 0.0
        %340 = vmatpush.msra.mxu0 0.0
        %341 = vmatpush.msra.mxu0 0.0
        %342 = vmatpush.msra.mxu0 0.0
        %343 = vmatpush.msra.mxu0 0.0
        %344 = vmatpush.msra.mxu0 0.0
        %345 = vmatpush.msra.mxu0 0.0
        %346 = vmatpush.msra.mxu0 0.0
        %347 = vmatpush.msra.mxu0 0.0
        %348 = vmatpush.msra.mxu0 0.0
        %349 = vmatpush.msra.mxu0 0.0
        %350 = vmatpush.msra.mxu0 %v324
        %351 = vmatmul.f32.gmra.mxu0 %v314
        %v352 = vpop.f32.mrf.mxu0
        %v353 = vadd.f32 0.0, %v352
        %354 = vmatmul.f32.gmra.mxu0 %v317
        %v355 = vpop.f32.mrf.mxu0
        %v356 = vadd.f32 0.0, %v355
        %357 = vmatmul.f32.gmra.mxu0 %v320
        %v358 = vpop.f32.mrf.mxu0
        %v359 = vadd.f32 0.0, %v358
        %360 = vdwg.mxu0
        %361 = vmatpush.msra.mxu0 0.0
        %362 = vmatpush.msra.mxu0 0.0
        %363 = vmatpush.msra.mxu0 0.0
        %364 = vmatpush.msra.mxu0 0.0
        %365 = vmatpush.msra.mxu0 0.0
        %366 = vmatpush.msra.mxu0 0.0
        %367 = vmatpush.msra.mxu0 0.0
        %368 = vmatpush.msra.mxu0 0.0
        %369 = vmatpush.msra.mxu0 0.0
        %370 = vmatpush.msra.mxu0 0.0
        %371 = vmatpush.msra.mxu0 0.0
        %372 = vmatpush.msra.mxu0 0.0
        %373 = vmatpush.msra.mxu0 0.0
        %374 = vmatpush.msra.mxu0 0.0
        %375 = vmatpush.msra.mxu0 0.0
        %376 = vmatpush.msra.mxu0 %v327
        %377 = vmatmul.f32.gmra.mxu0 %v314
        %v378 = vpop.f32.mrf.mxu0
        %v379 = vadd.f32 0.0, %v378
        %380 = vmatmul.f32.gmra.mxu0 %v317
        %v381 = vpop.f32.mrf.mxu0
        %v382 = vadd.f32 0.0, %v381
        %383 = vmatmul.f32.gmra.mxu0 %v320
        %v384 = vpop.f32.mrf.mxu0
        %v385 = vadd.f32 0.0, %v384
        %386 = vdwg.mxu0
        %387 = vmatpush.msra.mxu0 0.0
        %388 = vmatpush.msra.mxu0 0.0
        %389 = vmatpush.msra.mxu0 0.0
        %390 = vmatpush.msra.mxu0 0.0
        %391 = vmatpush.msra.mxu0 0.0
        %392 = vmatpush.msra.mxu0 0.0
        %393 = vmatpush.msra.mxu0 0.0
        %394 = vmatpush.msra.mxu0 0.0
        %395 = vmatpush.msra.mxu0 0.0
        %396 = vmatpush.msra.mxu0 0.0
        %397 = vmatpush.msra.mxu0 0.0
        %398 = vmatpush.msra.mxu0 0.0
        %399 = vmatpush.msra.mxu0 0.0
        %400 = vmatpush.msra.mxu0 0.0
        %401 = vmatpush.msra.mxu0 0.0
        %402 = vmatpush.msra.mxu0 %v330
        %403 = vmatmul.f32.gmra.mxu0 %v314
        %v404 = vpop.f32.mrf.mxu0
        %v405 = vadd.f32 0.0, %v404
        %406 = vmatmul.f32.gmra.mxu0 %v317
        %v407 = vpop.f32.mrf.mxu0
        %v408 = vadd.f32 0.0, %v407
        %409 = vmatmul.f32.gmra.mxu0 %v320
        %v410 = vpop.f32.mrf.mxu0
        %v411 = vadd.f32 0.0, %v410
        %412 = vdwg.mxu0
        %413 = vmatpush.msra.mxu0 0.0
        %414 = vmatpush.msra.mxu0 0.0
        %415 = vmatpush.msra.mxu0 0.0
        %416 = vmatpush.msra.mxu0 0.0
        %417 = vmatpush.msra.mxu0 0.0
        %418 = vmatpush.msra.mxu0 0.0
        %419 = vmatpush.msra.mxu0 0.0
        %420 = vmatpush.msra.mxu0 0.0
        %421 = vmatpush.msra.mxu0 0.0
        %422 = vmatpush.msra.mxu0 0.0
        %423 = vmatpush.msra.mxu0 0.0
        %424 = vmatpush.msra.mxu0 0.0
        %425 = vmatpush.msra.mxu0 0.0
        %426 = vmatpush.msra.mxu0 0.0
        %427 = vmatpush.msra.mxu0 0.0
        %428 = vmatpush.msra.mxu0 %v333
        %429 = vmatmul.f32.gmra.mxu0 %v314
        %v430 = vpop.f32.mrf.mxu0
        %v431 = vadd.f32 0.0, %v430
        %432 = vmatmul.f32.gmra.mxu0 %v317
        %v433 = vpop.f32.mrf.mxu0
        %v434 = vadd.f32 0.0, %v433
        %435 = vmatmul.f32.gmra.mxu0 %v320
        %v436 = vpop.f32.mrf.mxu0
        %v437 = vadd.f32 0.0, %v436
        %438 = vdwg.mxu0
        %v439 = vmax.f32 %v353, 0.0
        %v440 = vmax.f32 %v379, 0.0
        %v441 = vmax.f32 %v405, 0.0
        %v442 = vmax.f32 %v431, 0.0
        %v443 = vmax.f32 %v356, 0.0
        %v444 = vmax.f32 %v382, 0.0
        %v445 = vmax.f32 %v408, 0.0
        %v446 = vmax.f32 %v434, 0.0
        %v447 = vmax.f32 %v359, 0.0
        %v448 = vmax.f32 %v385, 0.0
        %v449 = vmax.f32 %v411, 0.0
        %v450 = vmax.f32 %v437, 0.0
        %v451 = vld [vmem:[%s2] sm:$0xff]
        %v452 = vld [vmem:[%s2 + $0x8] sm:$0xff]
        %v453 = vld [vmem:[%s2 + $0x10] sm:$0xff]
        %455 = vset.pattern.permute.xlu0 0
        %456 = vperm.xlu0 %455, %v451
        %v457 = vpop.permute.xlu0 %456
        %460 = vset.pattern.permute.xlu0 0
        %461 = vperm.xlu0 %460, %v452
        %v462 = vpop.permute.xlu0 %461
        %465 = vset.pattern.permute.xlu0 0
        %466 = vperm.xlu0 %465, %v453
        %v467 = vpop.permute.xlu0 %466
        %v469 = vmul.f32 %v439, %v457
        %v470 = vmul.f32 %v440, %v457
        %v471 = vmul.f32 %v441, %v457
        %v472 = vmul.f32 %v443, %v462
        %v473 = vmul.f32 %v444, %v462
        %v474 = vmul.f32 %v445, %v462
        %v475 = vmul.f32 %v447, %v467
        %v476 = vmul.f32 %v448, %v467
        %v477 = vmul.f32 %v449, %v467
        %478 = vset.pattern.permute.xlu0 1
        %479 = vperm.xlu0 %478, %v451
        %v480 = vpop.permute.xlu0 %479
        %482 = vset.pattern.permute.xlu0 1
        %483 = vperm.xlu0 %482, %v452
        %v484 = vpop.permute.xlu0 %483
        %486 = vset.pattern.permute.xlu0 1
        %487 = vperm.xlu0 %486, %v453
        %v488 = vpop.permute.xlu0 %487
        %v490 = vmul.f32 %v439, %v480
        %v491 = vmul.f32 %v440, %v480
        %v492 = vmul.f32 %v441, %v480
        %v493 = vmul.f32 %v442, %v480
        %v494 = vmul.f32 %v443, %v484
        %v495 = vmul.f32 %v444, %v484
        %v496 = vmul.f32 %v445, %v484
        %v497 = vmul.f32 %v446, %v484
        %v498 = vmul.f32 %v447, %v488
        %v499 = vmul.f32 %v448, %v488
        %v500 = vmul.f32 %v449, %v488
        %v501 = vmul.f32 %v450, %v488
        %514 = vrot.lane.b32.xlu0 %v490, 127
        %v515 = vpop.permute.xlu0 %514
        %516 = vrot.lane.b32.xlu0 %v491, 127
        %v517 = vpop.permute.xlu0 %516
        %518 = vrot.lane.b32.xlu0 %v492, 127
        %v519 = vpop.permute.xlu0 %518
        %520 = vrot.lane.b32.xlu0 %v493, 127
        %v521 = vpop.permute.xlu0 %520
        %522 = vrot.lane.b32.xlu0 %v494, 127
        %v523 = vpop.permute.xlu0 %522
        %524 = vrot.lane.b32.xlu0 %v495, 127
        %v525 = vpop.permute.xlu0 %524
        %526 = vrot.lane.b32.xlu0 %v496, 127
        %v527 = vpop.permute.xlu0 %526
        %528 = vrot.lane.b32.xlu0 %v497, 127
        %v529 = vpop.permute.xlu0 %528
        %530 = vrot.lane.b32.xlu0 %v498, 127
        %v531 = vpop.permute.xlu0 %530
        %532 = vrot.lane.b32.xlu0 %v499, 127
        %v533 = vpop.permute.xlu0 %532
        %534 = vrot.lane.b32.xlu0 %v500, 127
        %v535 = vpop.permute.xlu0 %534
        %536 = vrot.lane.b32.xlu0 %v501, 127
        %v537 = vpop.permute.xlu0 %536
        %vm538 = vcmask 1039360
        %v539 = vsel %vm538, %v515, %v517
        %v540 = vsel %vm538, %v517, %v519
        %v541 = vsel %vm538, %v519, %v521
        %v542 = vsel %vm538, %v523, %v525
        %v543 = vsel %vm538, %v525, %v527
        %v544 = vsel %vm538, %v527, %v529
        %v545 = vsel %vm538, %v531, %v533
        %v546 = vsel %vm538, %v533, %v535
        %v547 = vsel %vm538, %v535, %v537
        %v557 = vadd.f32 %v469, %v539
        %v558 = vadd.f32 %v470, %v540
        %v559 = vadd.f32 %v471, %v541
        %v560 = vadd.f32 %v472, %v542
        %v561 = vadd.f32 %v473, %v543
        %v562 = vadd.f32 %v474, %v544
        %v563 = vadd.f32 %v475, %v545
        %v564 = vadd.f32 %v476, %v546
        %v565 = vadd.f32 %v477, %v547
        %566 = vset.pattern.permute.xlu0 2
        %567 = vperm.xlu0 %566, %v451
        %v568 = vpop.permute.xlu0 %567
        %570 = vset.pattern.permute.xlu0 2
        %571 = vperm.xlu0 %570, %v452
        %v572 = vpop.permute.xlu0 %571
        %574 = vset.pattern.permute.xlu0 2
        %575 = vperm.xlu0 %574, %v453
        %v576 = vpop.permute.xlu0 %575
        %v578 = vmul.f32 %v439, %v568
        %v579 = vmul.f32 %v440, %v568
        %v580 = vmul.f32 %v441, %v568
        %v581 = vmul.f32 %v442, %v568
        %v582 = vmul.f32 %v443, %v572
        %v583 = vmul.f32 %v444, %v572
        %v584 = vmul.f32 %v445, %v572
        %v585 = vmul.f32 %v446, %v572
        %v586 = vmul.f32 %v447, %v576
        %v587 = vmul.f32 %v448, %v576
        %v588 = vmul.f32 %v449, %v576
        %v589 = vmul.f32 %v450, %v576
        %602 = vrot.lane.b32.xlu0 %v578, 126
        %v603 = vpop.permute.xlu0 %602
        %604 = vrot.lane.b32.xlu0 %v579, 126
        %v605 = vpop.permute.xlu0 %604
        %606 = vrot.lane.b32.xlu0 %v580, 126
        %v607 = vpop.permute.xlu0 %606
        %608 = vrot.lane.b32.xlu0 %v581, 126
        %v609 = vpop.permute.xlu0 %608
        %610 = vrot.lane.b32.xlu0 %v582, 126
        %v611 = vpop.permute.xlu0 %610
        %612 = vrot.lane.b32.xlu0 %v583, 126
        %v613 = vpop.permute.xlu0 %612
        %614 = vrot.lane.b32.xlu0 %v584, 126
        %v615 = vpop.permute.xlu0 %614
        %616 = vrot.lane.b32.xlu0 %v585, 126
        %v617 = vpop.permute.xlu0 %616
        %618 = vrot.lane.b32.xlu0 %v586, 126
        %v619 = vpop.permute.xlu0 %618
        %620 = vrot.lane.b32.xlu0 %v587, 126
        %v621 = vpop.permute.xlu0 %620
        %622 = vrot.lane.b32.xlu0 %v588, 126
        %v623 = vpop.permute.xlu0 %622
        %624 = vrot.lane.b32.xlu0 %v589, 126
        %v625 = vpop.permute.xlu0 %624
        %vm626 = vcmask 1031168
        %v627 = vsel %vm626, %v603, %v605
        %v628 = vsel %vm626, %v605, %v607
        %v629 = vsel %vm626, %v607, %v609
        %v630 = vsel %vm626, %v611, %v613
        %v631 = vsel %vm626, %v613, %v615
        %v632 = vsel %vm626, %v615, %v617
        %v633 = vsel %vm626, %v619, %v621
        %v634 = vsel %vm626, %v621, %v623
        %v635 = vsel %vm626, %v623, %v625
        %v645 = vadd.f32 %v557, %v627
        %v646 = vadd.f32 %v558, %v628
        %v647 = vadd.f32 %v559, %v629
        %v648 = vadd.f32 %v560, %v630
        %v649 = vadd.f32 %v561, %v631
        %v650 = vadd.f32 %v562, %v632
        %v651 = vadd.f32 %v563, %v633
        %v652 = vadd.f32 %v564, %v634
        %v653 = vadd.f32 %v565, %v635
        %654 = vset.pattern.permute.xlu0 3
        %655 = vperm.xlu0 %654, %v451
        %v656 = vpop.permute.xlu0 %655
        %658 = vset.pattern.permute.xlu0 3
        %659 = vperm.xlu0 %658, %v452
        %v660 = vpop.permute.xlu0 %659
        %662 = vset.pattern.permute.xlu0 3
        %663 = vperm.xlu0 %662, %v453
        %v664 = vpop.permute.xlu0 %663
        %v666 = vmul.f32 %v439, %v656
        %v667 = vmul.f32 %v440, %v656
        %v668 = vmul.f32 %v441, %v656
        %v669 = vmul.f32 %v442, %v656
        %v670 = vmul.f32 %v443, %v660
        %v671 = vmul.f32 %v444, %v660
        %v672 = vmul.f32 %v445, %v660
        %v673 = vmul.f32 %v446, %v660
        %v674 = vmul.f32 %v447, %v664
        %v675 = vmul.f32 %v448, %v664
        %v676 = vmul.f32 %v449, %v664
        %v677 = vmul.f32 %v450, %v664
        %690 = vrot.lane.b32.xlu0 %v666, 104
        %v691 = vpop.permute.xlu0 %690
        %692 = vrot.lane.b32.xlu0 %v667, 104
        %v693 = vpop.permute.xlu0 %692
        %694 = vrot.lane.b32.xlu0 %v668, 104
        %v695 = vpop.permute.xlu0 %694
        %696 = vrot.lane.b32.xlu0 %v669, 104
        %v697 = vpop.permute.xlu0 %696
        %698 = vrot.lane.b32.xlu0 %v670, 104
        %v699 = vpop.permute.xlu0 %698
        %700 = vrot.lane.b32.xlu0 %v671, 104
        %v701 = vpop.permute.xlu0 %700
        %702 = vrot.lane.b32.xlu0 %v672, 104
        %v703 = vpop.permute.xlu0 %702
        %704 = vrot.lane.b32.xlu0 %v673, 104
        %v705 = vpop.permute.xlu0 %704
        %706 = vrot.lane.b32.xlu0 %v674, 104
        %v707 = vpop.permute.xlu0 %706
        %708 = vrot.lane.b32.xlu0 %v675, 104
        %v709 = vpop.permute.xlu0 %708
        %710 = vrot.lane.b32.xlu0 %v676, 104
        %v711 = vpop.permute.xlu0 %710
        %712 = vrot.lane.b32.xlu0 %v677, 104
        %v713 = vpop.permute.xlu0 %712
        %vm714 = vcmask 850944
        %v715 = vsel %vm714, %v691, %v693
        %v716 = vsel %vm714, %v693, %v695
        %v717 = vsel %vm714, %v695, %v697
        %v718 = vsel %vm714, %v699, %v701
        %v719 = vsel %vm714, %v701, %v703
        %v720 = vsel %vm714, %v703, %v705
        %v721 = vsel %vm714, %v707, %v709
        %v722 = vsel %vm714, %v709, %v711
        %v723 = vsel %vm714, %v711, %v713
        %v733 = vadd.f32 %v645, %v715
        %v734 = vadd.f32 %v646, %v716
        %v735 = vadd.f32 %v647, %v717
        %v736 = vadd.f32 %v648, %v718
        %v737 = vadd.f32 %v649, %v719
        %v738 = vadd.f32 %v650, %v720
        %v739 = vadd.f32 %v651, %v721
        %v740 = vadd.f32 %v652, %v722
        %v741 = vadd.f32 %v653, %v723
        %742 = vset.pattern.permute.xlu0 4
        %743 = vperm.xlu0 %742, %v451
        %v744 = vpop.permute.xlu0 %743
        %746 = vset.pattern.permute.xlu0 4
        %747 = vperm.xlu0 %746, %v452
        %v748 = vpop.permute.xlu0 %747
        %750 = vset.pattern.permute.xlu0 4
        %751 = vperm.xlu0 %750, %v453
        %v752 = vpop.permute.xlu0 %751
        %v754 = vmul.f32 %v439, %v744
        %v755 = vmul.f32 %v440, %v744
        %v756 = vmul.f32 %v441, %v744
        %v757 = vmul.f32 %v442, %v744
        %v758 = vmul.f32 %v443, %v748
        %v759 = vmul.f32 %v444, %v748
        %v760 = vmul.f32 %v445, %v748
        %v761 = vmul.f32 %v446, %v748
        %v762 = vmul.f32 %v447, %v752
        %v763 = vmul.f32 %v448, %v752
        %v764 = vmul.f32 %v449, %v752
        %v765 = vmul.f32 %v450, %v752
        %778 = vrot.lane.b32.xlu0 %v754, 103
        %v779 = vpop.permute.xlu0 %778
        %780 = vrot.lane.b32.xlu0 %v755, 103
        %v781 = vpop.permute.xlu0 %780
        %782 = vrot.lane.b32.xlu0 %v756, 103
        %v783 = vpop.permute.xlu0 %782
        %784 = vrot.lane.b32.xlu0 %v757, 103
        %v785 = vpop.permute.xlu0 %784
        %786 = vrot.lane.b32.xlu0 %v758, 103
        %v787 = vpop.permute.xlu0 %786
        %788 = vrot.lane.b32.xlu0 %v759, 103
        %v789 = vpop.permute.xlu0 %788
        %790 = vrot.lane.b32.xlu0 %v760, 103
        %v791 = vpop.permute.xlu0 %790
        %792 = vrot.lane.b32.xlu0 %v761, 103
        %v793 = vpop.permute.xlu0 %792
        %794 = vrot.lane.b32.xlu0 %v762, 103
        %v795 = vpop.permute.xlu0 %794
        %796 = vrot.lane.b32.xlu0 %v763, 103
        %v797 = vpop.permute.xlu0 %796
        %798 = vrot.lane.b32.xlu0 %v764, 103
        %v799 = vpop.permute.xlu0 %798
        %800 = vrot.lane.b32.xlu0 %v765, 103
        %v801 = vpop.permute.xlu0 %800
        %vm802 = vcmask 842752
        %v803 = vsel %vm802, %v779, %v781
        %v804 = vsel %vm802, %v781, %v783
        %v805 = vsel %vm802, %v783, %v785
        %v806 = vsel %vm802, %v787, %v789
        %v807 = vsel %vm802, %v789, %v791
        %v808 = vsel %vm802, %v791, %v793
        %v809 = vsel %vm802, %v795, %v797
        %v810 = vsel %vm802, %v797, %v799
        %v811 = vsel %vm802, %v799, %v801
        %v821 = vadd.f32 %v733, %v803
        %v822 = vadd.f32 %v734, %v804
        %v823 = vadd.f32 %v735, %v805
        %v824 = vadd.f32 %v736, %v806
        %v825 = vadd.f32 %v737, %v807
        %v826 = vadd.f32 %v738, %v808
        %v827 = vadd.f32 %v739, %v809
        %v828 = vadd.f32 %v740, %v810
        %v829 = vadd.f32 %v741, %v811
        %830 = vset.pattern.permute.xlu0 5
        %831 = vperm.xlu0 %830, %v451
        %v832 = vpop.permute.xlu0 %831
        %834 = vset.pattern.permute.xlu0 5
        %835 = vperm.xlu0 %834, %v452
        %v836 = vpop.permute.xlu0 %835
        %838 = vset.pattern.permute.xlu0 5
        %839 = vperm.xlu0 %838, %v453
        %v840 = vpop.permute.xlu0 %839
        %v842 = vmul.f32 %v439, %v832
        %v843 = vmul.f32 %v440, %v832
        %v844 = vmul.f32 %v441, %v832
        %v845 = vmul.f32 %v442, %v832
        %v846 = vmul.f32 %v443, %v836
        %v847 = vmul.f32 %v444, %v836
        %v848 = vmul.f32 %v445, %v836
        %v849 = vmul.f32 %v446, %v836
        %v850 = vmul.f32 %v447, %v840
        %v851 = vmul.f32 %v448, %v840
        %v852 = vmul.f32 %v449, %v840
        %v853 = vmul.f32 %v450, %v840
        %866 = vrot.lane.b32.xlu0 %v842, 102
        %v867 = vpop.permute.xlu0 %866
        %868 = vrot.lane.b32.xlu0 %v843, 102
        %v869 = vpop.permute.xlu0 %868
        %870 = vrot.lane.b32.xlu0 %v844, 102
        %v871 = vpop.permute.xlu0 %870
        %872 = vrot.lane.b32.xlu0 %v845, 102
        %v873 = vpop.permute.xlu0 %872
        %874 = vrot.lane.b32.xlu0 %v846, 102
        %v875 = vpop.permute.xlu0 %874
        %876 = vrot.lane.b32.xlu0 %v847, 102
        %v877 = vpop.permute.xlu0 %876
        %878 = vrot.lane.b32.xlu0 %v848, 102
        %v879 = vpop.permute.xlu0 %878
        %880 = vrot.lane.b32.xlu0 %v849, 102
        %v881 = vpop.permute.xlu0 %880
        %882 = vrot.lane.b32.xlu0 %v850, 102
        %v883 = vpop.permute.xlu0 %882
        %884 = vrot.lane.b32.xlu0 %v851, 102
        %v885 = vpop.permute.xlu0 %884
        %886 = vrot.lane.b32.xlu0 %v852, 102
        %v887 = vpop.permute.xlu0 %886
        %888 = vrot.lane.b32.xlu0 %v853, 102
        %v889 = vpop.permute.xlu0 %888
        %vm890 = vcmask 834560
        %v891 = vsel %vm890, %v867, %v869
        %v892 = vsel %vm890, %v869, %v871
        %v893 = vsel %vm890, %v871, %v873
        %v894 = vsel %vm890, %v875, %v877
        %v895 = vsel %vm890, %v877, %v879
        %v896 = vsel %vm890, %v879, %v881
        %v897 = vsel %vm890, %v883, %v885
        %v898 = vsel %vm890, %v885, %v887
        %v899 = vsel %vm890, %v887, %v889
        %v909 = vadd.f32 %v821, %v891
        %v910 = vadd.f32 %v822, %v892
        %v911 = vadd.f32 %v823, %v893
        %v912 = vadd.f32 %v824, %v894
        %v913 = vadd.f32 %v825, %v895
        %v914 = vadd.f32 %v826, %v896
        %v915 = vadd.f32 %v827, %v897
        %v916 = vadd.f32 %v828, %v898
        %v917 = vadd.f32 %v829, %v899
        %918 = vset.pattern.permute.xlu0 6
        %919 = vperm.xlu0 %918, %v451
        %v920 = vpop.permute.xlu0 %919
        %922 = vset.pattern.permute.xlu0 6
        %923 = vperm.xlu0 %922, %v452
        %v924 = vpop.permute.xlu0 %923
        %926 = vset.pattern.permute.xlu0 6
        %927 = vperm.xlu0 %926, %v453
        %v928 = vpop.permute.xlu0 %927
        %v930 = vmul.f32 %v439, %v920
        %v931 = vmul.f32 %v440, %v920
        %v932 = vmul.f32 %v441, %v920
        %v933 = vmul.f32 %v442, %v920
        %v934 = vmul.f32 %v443, %v924
        %v935 = vmul.f32 %v444, %v924
        %v936 = vmul.f32 %v445, %v924
        %v937 = vmul.f32 %v446, %v924
        %v938 = vmul.f32 %v447, %v928
        %v939 = vmul.f32 %v448, %v928
        %v940 = vmul.f32 %v449, %v928
        %v941 = vmul.f32 %v450, %v928
        %954 = vrot.lane.b32.xlu0 %v930, 80
        %v955 = vpop.permute.xlu0 %954
        %956 = vrot.lane.b32.xlu0 %v931, 80
        %v957 = vpop.permute.xlu0 %956
        %958 = vrot.lane.b32.xlu0 %v932, 80
        %v959 = vpop.permute.xlu0 %958
        %960 = vrot.lane.b32.xlu0 %v933, 80
        %v961 = vpop.permute.xlu0 %960
        %962 = vrot.lane.b32.xlu0 %v934, 80
        %v963 = vpop.permute.xlu0 %962
        %964 = vrot.lane.b32.xlu0 %v935, 80
        %v965 = vpop.permute.xlu0 %964
        %966 = vrot.lane.b32.xlu0 %v936, 80
        %v967 = vpop.permute.xlu0 %966
        %968 = vrot.lane.b32.xlu0 %v937, 80
        %v969 = vpop.permute.xlu0 %968
        %970 = vrot.lane.b32.xlu0 %v938, 80
        %v971 = vpop.permute.xlu0 %970
        %972 = vrot.lane.b32.xlu0 %v939, 80
        %v973 = vpop.permute.xlu0 %972
        %974 = vrot.lane.b32.xlu0 %v940, 80
        %v975 = vpop.permute.xlu0 %974
        %976 = vrot.lane.b32.xlu0 %v941, 80
        %v977 = vpop.permute.xlu0 %976
        %vm978 = vcmask 654336
        %v979 = vsel %vm978, %v955, %v957
        %v980 = vsel %vm978, %v957, %v959
        %v981 = vsel %vm978, %v959, %v961
        %v982 = vsel %vm978, %v963, %v965
        %v983 = vsel %vm978, %v965, %v967
        %v984 = vsel %vm978, %v967, %v969
        %v985 = vsel %vm978, %v971, %v973
        %v986 = vsel %vm978, %v973, %v975
        %v987 = vsel %vm978, %v975, %v977
        %v997 = vadd.f32 %v909, %v979
        %v998 = vadd.f32 %v910, %v980
        %v999 = vadd.f32 %v911, %v981
        %v1000 = vadd.f32 %v912, %v982
        %v1001 = vadd.f32 %v913, %v983
        %v1002 = vadd.f32 %v914, %v984
        %v1003 = vadd.f32 %v915, %v985
        %v1004 = vadd.f32 %v916, %v986
        %v1005 = vadd.f32 %v917, %v987
        %1006 = vset.pattern.permute.xlu0 7
        %1007 = vperm.xlu0 %1006, %v451
        %v1008 = vpop.permute.xlu0 %1007
        %1010 = vset.pattern.permute.xlu0 7
        %1011 = vperm.xlu0 %1010, %v452
        %v1012 = vpop.permute.xlu0 %1011
        %1014 = vset.pattern.permute.xlu0 7
        %1015 = vperm.xlu0 %1014, %v453
        %v1016 = vpop.permute.xlu0 %1015
        %v1018 = vmul.f32 %v439, %v1008
        %v1019 = vmul.f32 %v440, %v1008
        %v1020 = vmul.f32 %v441, %v1008
        %v1021 = vmul.f32 %v442, %v1008
        %v1022 = vmul.f32 %v443, %v1012
        %v1023 = vmul.f32 %v444, %v1012
        %v1024 = vmul.f32 %v445, %v1012
        %v1025 = vmul.f32 %v446, %v1012
        %v1026 = vmul.f32 %v447, %v1016
        %v1027 = vmul.f32 %v448, %v1016
        %v1028 = vmul.f32 %v449, %v1016
        %v1029 = vmul.f32 %v450, %v1016
        %1042 = vrot.lane.b32.xlu0 %v1018, 79
        %v1043 = vpop.permute.xlu0 %1042
        %1044 = vrot.lane.b32.xlu0 %v1019, 79
        %v1045 = vpop.permute.xlu0 %1044
        %1046 = vrot.lane.b32.xlu0 %v1020, 79
        %v1047 = vpop.permute.xlu0 %1046
        %1048 = vrot.lane.b32.xlu0 %v1021, 79
        %v1049 = vpop.permute.xlu0 %1048
        %1050 = vrot.lane.b32.xlu0 %v1022, 79
        %v1051 = vpop.permute.xlu0 %1050
        %1052 = vrot.lane.b32.xlu0 %v1023, 79
        %v1053 = vpop.permute.xlu0 %1052
        %1054 = vrot.lane.b32.xlu0 %v1024, 79
        %v1055 = vpop.permute.xlu0 %1054
        %1056 = vrot.lane.b32.xlu0 %v1025, 79
        %v1057 = vpop.permute.xlu0 %1056
        %1058 = vrot.lane.b32.xlu0 %v1026, 79
        %v1059 = vpop.permute.xlu0 %1058
        %1060 = vrot.lane.b32.xlu0 %v1027, 79
        %v1061 = vpop.permute.xlu0 %1060
        %1062 = vrot.lane.b32.xlu0 %v1028, 79
        %v1063 = vpop.permute.xlu0 %1062
        %1064 = vrot.lane.b32.xlu0 %v1029, 79
        %v1065 = vpop.permute.xlu0 %1064
        %vm1066 = vcmask 646144
        %v1067 = vsel %vm1066, %v1043, %v1045
        %v1068 = vsel %vm1066, %v1045, %v1047
        %v1069 = vsel %vm1066, %v1047, %v1049
        %v1070 = vsel %vm1066, %v1051, %v1053
        %v1071 = vsel %vm1066, %v1053, %v1055
        %v1072 = vsel %vm1066, %v1055, %v1057
        %v1073 = vsel %vm1066, %v1059, %v1061
        %v1074 = vsel %vm1066, %v1061, %v1063
        %v1075 = vsel %vm1066, %v1063, %v1065
        %v1085 = vadd.f32 %v997, %v1067
        %v1086 = vadd.f32 %v998, %v1068
        %v1087 = vadd.f32 %v999, %v1069
        %v1088 = vadd.f32 %v1000, %v1070
        %v1089 = vadd.f32 %v1001, %v1071
        %v1090 = vadd.f32 %v1002, %v1072
        %v1091 = vadd.f32 %v1003, %v1073
        %v1092 = vadd.f32 %v1004, %v1074
        %v1093 = vadd.f32 %v1005, %v1075
        %1094 = vset.pattern.permute.xlu0 8
        %1095 = vperm.xlu0 %1094, %v451
        %v1096 = vpop.permute.xlu0 %1095
        %1098 = vset.pattern.permute.xlu0 8
        %1099 = vperm.xlu0 %1098, %v452
        %v1100 = vpop.permute.xlu0 %1099
        %1102 = vset.pattern.permute.xlu0 8
        %1103 = vperm.xlu0 %1102, %v453
        %v1104 = vpop.permute.xlu0 %1103
        %v1106 = vmul.f32 %v439, %v1096
        %v1107 = vmul.f32 %v440, %v1096
        %v1108 = vmul.f32 %v441, %v1096
        %v1109 = vmul.f32 %v442, %v1096
        %v1110 = vmul.f32 %v443, %v1100
        %v1111 = vmul.f32 %v444, %v1100
        %v1112 = vmul.f32 %v445, %v1100
        %v1113 = vmul.f32 %v446, %v1100
        %v1114 = vmul.f32 %v447, %v1104
        %v1115 = vmul.f32 %v448, %v1104
        %v1116 = vmul.f32 %v449, %v1104
        %v1117 = vmul.f32 %v450, %v1104
        %1130 = vrot.lane.b32.xlu0 %v1106, 78
        %v1131 = vpop.permute.xlu0 %1130
        %1132 = vrot.lane.b32.xlu0 %v1107, 78
        %v1133 = vpop.permute.xlu0 %1132
        %1134 = vrot.lane.b32.xlu0 %v1108, 78
        %v1135 = vpop.permute.xlu0 %1134
        %1136 = vrot.lane.b32.xlu0 %v1109, 78
        %v1137 = vpop.permute.xlu0 %1136
        %1138 = vrot.lane.b32.xlu0 %v1110, 78
        %v1139 = vpop.permute.xlu0 %1138
        %1140 = vrot.lane.b32.xlu0 %v1111, 78
        %v1141 = vpop.permute.xlu0 %1140
        %1142 = vrot.lane.b32.xlu0 %v1112, 78
        %v1143 = vpop.permute.xlu0 %1142
        %1144 = vrot.lane.b32.xlu0 %v1113, 78
        %v1145 = vpop.permute.xlu0 %1144
        %1146 = vrot.lane.b32.xlu0 %v1114, 78
        %v1147 = vpop.permute.xlu0 %1146
        %1148 = vrot.lane.b32.xlu0 %v1115, 78
        %v1149 = vpop.permute.xlu0 %1148
        %1150 = vrot.lane.b32.xlu0 %v1116, 78
        %v1151 = vpop.permute.xlu0 %1150
        %1152 = vrot.lane.b32.xlu0 %v1117, 78
        %v1153 = vpop.permute.xlu0 %1152
        %vm1154 = vcmask 637952
        %v1155 = vsel %vm1154, %v1131, %v1133
        %v1156 = vsel %vm1154, %v1133, %v1135
        %v1157 = vsel %vm1154, %v1135, %v1137
        %v1158 = vsel %vm1154, %v1139, %v1141
        %v1159 = vsel %vm1154, %v1141, %v1143
        %v1160 = vsel %vm1154, %v1143, %v1145
        %v1161 = vsel %vm1154, %v1147, %v1149
        %v1162 = vsel %vm1154, %v1149, %v1151
        %v1163 = vsel %vm1154, %v1151, %v1153
        %v1173 = vadd.f32 %v1085, %v1155
        %v1174 = vadd.f32 %v1086, %v1156
        %v1175 = vadd.f32 %v1087, %v1157
        %v1176 = vadd.f32 %v1088, %v1158
        %v1177 = vadd.f32 %v1089, %v1159
        %v1178 = vadd.f32 %v1090, %v1160
        %v1179 = vadd.f32 %v1091, %v1161
        %v1180 = vadd.f32 %v1092, %v1162
        %v1181 = vadd.f32 %v1093, %v1163
        %v1182 = vld [vmem:[%s3] sm:$0xff]
        %v1183 = vld [vmem:[%s3 + $0x8] sm:$0xff]
        %v1184 = vld [vmem:[%s3 + $0x10] sm:$0xff]
        %1186 = vset.pattern.permute.xlu0 0
        %1187 = vperm.xlu0 %1186, %v1182
        %v1188 = vpop.permute.xlu0 %1187
        %1191 = vset.pattern.permute.xlu0 0
        %1192 = vperm.xlu0 %1191, %v1183
        %v1193 = vpop.permute.xlu0 %1192
        %1196 = vset.pattern.permute.xlu0 0
        %1197 = vperm.xlu0 %1196, %v1184
        %v1198 = vpop.permute.xlu0 %1197
        %v1200 = vadd.f32 %v1173, %v1188
        %v1201 = vadd.f32 %v1174, %v1188
        %v1202 = vadd.f32 %v1175, %v1188
        %v1203 = vadd.f32 %v1176, %v1193
        %v1204 = vadd.f32 %v1177, %v1193
        %v1205 = vadd.f32 %v1178, %v1193
        %v1206 = vadd.f32 %v1179, %v1198
        %v1207 = vadd.f32 %v1180, %v1198
        %v1208 = vadd.f32 %v1181, %v1198
        %v1209 = vmax.f32 %v1200, 0.0
        %v1210 = vmax.f32 %v1201, 0.0
        %v1211 = vmax.f32 %v1202, 0.0
        %v1212 = vmax.f32 %v1203, 0.0
        %v1213 = vmax.f32 %v1204, 0.0
        %v1214 = vmax.f32 %v1205, 0.0
        %v1215 = vmax.f32 %v1206, 0.0
        %v1216 = vmax.f32 %v1207, 0.0
        %v1217 = vmax.f32 %v1208, 0.0
        %v1218 = vld [vmem:[%s4] sm:$0xff]
        %v1219 = vld [vmem:[%s5] sm:$0xff]
        %1221 = vset.pattern.permute.xlu0 0
        %1222 = vperm.xlu0 %1221, %v1219
        %v1223 = vpop.permute.xlu0 %1222
        %vm1225 = vcmask 195584
        %v1227 = vsel %vm1225, %v1218, 0
        %1229 = vmatpush.msra.mxu0 0.0
        %1230 = vmatpush.msra.mxu0 0.0
        %1231 = vmatpush.msra.mxu0 0.0
        %1232 = vmatpush.msra.mxu0 0.0
        %1233 = vmatpush.msra.mxu0 0.0
        %1234 = vmatpush.msra.mxu0 0.0
        %1235 = vmatpush.msra.mxu0 0.0
        %1236 = vmatpush.msra.mxu0 0.0
        %1237 = vmatpush.msra.mxu0 0.0
        %1238 = vmatpush.msra.mxu0 0.0
        %1239 = vmatpush.msra.mxu0 0.0
        %1240 = vmatpush.msra.mxu0 0.0
        %1241 = vmatpush.msra.mxu0 0.0
        %1242 = vmatpush.msra.mxu0 %v1215
        %1243 = vmatpush.msra.mxu0 %v1212
        %1244 = vmatpush.msra.mxu0 %v1209
        %1245 = vmatmul.f32.gmra.mxu0 %v1227
        %v1246 = vpop.f32.mrf.mxu0
        %v1247 = vadd.f32 %v1223, %v1246
        %1248 = vdwg.mxu0
        %1249 = vmatpush.msra.mxu0 0.0
        %1250 = vmatpush.msra.mxu0 0.0
        %1251 = vmatpush.msra.mxu0 0.0
        %1252 = vmatpush.msra.mxu0 0.0
        %1253 = vmatpush.msra.mxu0 0.0
        %1254 = vmatpush.msra.mxu0 0.0
        %1255 = vmatpush.msra.mxu0 0.0
        %1256 = vmatpush.msra.mxu0 0.0
        %1257 = vmatpush.msra.mxu0 0.0
        %1258 = vmatpush.msra.mxu0 0.0
        %1259 = vmatpush.msra.mxu0 0.0
        %1260 = vmatpush.msra.mxu0 0.0
        %1261 = vmatpush.msra.mxu0 0.0
        %1262 = vmatpush.msra.mxu0 %v1216
        %1263 = vmatpush.msra.mxu0 %v1213
        %1264 = vmatpush.msra.mxu0 %v1210
        %1265 = vmatmul.f32.gmra.mxu0 %v1227
        %v1266 = vpop.f32.mrf.mxu0
        %v1267 = vadd.f32 %v1223, %v1266
        %1268 = vdwg.mxu0
        %1269 = vmatpush.msra.mxu0 0.0
        %1270 = vmatpush.msra.mxu0 0.0
        %1271 = vmatpush.msra.mxu0 0.0
        %1272 = vmatpush.msra.mxu0 0.0
        %1273 = vmatpush.msra.mxu0 0.0
        %1274 = vmatpush.msra.mxu0 0.0
        %1275 = vmatpush.msra.mxu0 0.0
        %1276 = vmatpush.msra.mxu0 0.0
        %1277 = vmatpush.msra.mxu0 0.0
        %1278 = vmatpush.msra.mxu0 0.0
        %1279 = vmatpush.msra.mxu0 0.0
        %1280 = vmatpush.msra.mxu0 0.0
        %1281 = vmatpush.msra.mxu0 0.0
        %1282 = vmatpush.msra.mxu0 %v1217
        %1283 = vmatpush.msra.mxu0 %v1214
        %1284 = vmatpush.msra.mxu0 %v1211
        %1285 = vmatmul.f32.gmra.mxu0 %v1227
        %v1286 = vpop.f32.mrf.mxu0
        %v1287 = vadd.f32 %v1223, %v1286
        %1288 = vdwg.mxu0
        %v1289 = vld [vmem:[%s6] sm:$0xff]
        %1290 = vrot.lane.b32.xlu0 %v305, 103
        %v1291 = vpop.permute.xlu0 %1290
        %1292 = vrot.lane.b32.xlu0 %v306, 103
        %v1293 = vpop.permute.xlu0 %1292
        %1294 = vrot.lane.b32.xlu0 %v307, 103
        %v1295 = vpop.permute.xlu0 %1294
        %1296 = vrot.lane.b32.xlu0 %v308, 103
        %v1297 = vpop.permute.xlu0 %1296
        %v1298 = vsel %vm802, %v1291, %v1293
        %v1299 = vsel %vm802, %v1293, %v1295
        %v1300 = vsel %vm802, %v1295, %v1297
        %v1302 = vsel %vm312, %v1289, 0
        %v1304 = vsel %vm322, %v1298, 0
        %v1306 = vsel %vm322, %v1299, 0
        %v1308 = vsel %vm322, %v1300, 0
        %1310 = vmatpush.msra.mxu0 0.0
        %1311 = vmatpush.msra.mxu0 0.0
        %1312 = vmatpush.msra.mxu0 0.0
        %1313 = vmatpush.msra.mxu0 0.0
        %1314 = vmatpush.msra.mxu0 0.0
        %1315 = vmatpush.msra.mxu0 0.0
        %1316 = vmatpush.msra.mxu0 0.0
        %1317 = vmatpush.msra.mxu0 0.0
        %1318 = vmatpush.msra.mxu0 0.0
        %1319 = vmatpush.msra.mxu0 0.0
        %1320 = vmatpush.msra.mxu0 0.0
        %1321 = vmatpush.msra.mxu0 0.0
        %1322 = vmatpush.msra.mxu0 0.0
        %1323 = vmatpush.msra.mxu0 0.0
        %1324 = vmatpush.msra.mxu0 0.0
        %1325 = vmatpush.msra.mxu0 %v1304
        %1326 = vmatmul.f32.gmra.mxu0 %v1302
        %v1327 = vpop.f32.mrf.mxu0
        %v1328 = vadd.f32 0.0, %v1327
        %1329 = vdwg.mxu0
        %1330 = vmatpush.msra.mxu0 0.0
        %1331 = vmatpush.msra.mxu0 0.0
        %1332 = vmatpush.msra.mxu0 0.0
        %1333 = vmatpush.msra.mxu0 0.0
        %1334 = vmatpush.msra.mxu0 0.0
        %1335 = vmatpush.msra.mxu0 0.0
        %1336 = vmatpush.msra.mxu0 0.0
        %1337 = vmatpush.msra.mxu0 0.0
        %1338 = vmatpush.msra.mxu0 0.0
        %1339 = vmatpush.msra.mxu0 0.0
        %1340 = vmatpush.msra.mxu0 0.0
        %1341 = vmatpush.msra.mxu0 0.0
        %1342 = vmatpush.msra.mxu0 0.0
        %1343 = vmatpush.msra.mxu0 0.0
        %1344 = vmatpush.msra.mxu0 0.0
        %1345 = vmatpush.msra.mxu0 %v1306
        %1346 = vmatmul.f32.gmra.mxu0 %v1302
        %v1347 = vpop.f32.mrf.mxu0
        %v1348 = vadd.f32 0.0, %v1347
        %1349 = vdwg.mxu0
        %1350 = vmatpush.msra.mxu0 0.0
        %1351 = vmatpush.msra.mxu0 0.0
        %1352 = vmatpush.msra.mxu0 0.0
        %1353 = vmatpush.msra.mxu0 0.0
        %1354 = vmatpush.msra.mxu0 0.0
        %1355 = vmatpush.msra.mxu0 0.0
        %1356 = vmatpush.msra.mxu0 0.0
        %1357 = vmatpush.msra.mxu0 0.0
        %1358 = vmatpush.msra.mxu0 0.0
        %1359 = vmatpush.msra.mxu0 0.0
        %1360 = vmatpush.msra.mxu0 0.0
        %1361 = vmatpush.msra.mxu0 0.0
        %1362 = vmatpush.msra.mxu0 0.0
        %1363 = vmatpush.msra.mxu0 0.0
        %1364 = vmatpush.msra.mxu0 0.0
        %1365 = vmatpush.msra.mxu0 %v1308
        %1366 = vmatmul.f32.gmra.mxu0 %v1302
        %v1367 = vpop.f32.mrf.mxu0
        %v1368 = vadd.f32 0.0, %v1367
        %1369 = vdwg.mxu0
        %v1370 = vadd.f32 %v1247, %v1328
        %v1371 = vadd.f32 %v1267, %v1348
        %v1372 = vadd.f32 %v1287, %v1368
        %1373 = vst [vmem:[%s295] sm:$0xff] %v1370
        %1374 = vst [vmem:[%s295 + $0x8] sm:$0xff] %v1371
        %1375 = vst [vmem:[%s295 + $0x10] sm:$0xff] %v1372
        %s1376 = sand.u32 %s197, 1
        %s1377 = scalar_lea.sflag [#allocation3], %s1376
        %s1378 = sand.u32 %s197, 1
        %s1379 = smul.addr %s1378, 24
        %s1380 = scalar_lea.vmem [#allocation2], %s1379
        // Predicated region
        $region49: #{tpu_custom_call.1} parent=47 // pred_check
          %p1381 = pneg %p207
        $region50: #{tpu_custom_call.1} parent=47 // pred_check_branch
          %1383 = sbr.rel (%p1381) target = $region52
        $region51: #{tpu_custom_call.1} parent=47 // pred_region
          %1385 = vsyncadd %s1377, 0
          %s1386 = smul.addr %s26, 3
          %s1387 = smul.addr %s25, 3
          %s1388 = sadd.s32 %s1386, %s1387
          %s1389 = smul.addr %s1388, 8
          %s1390 = scalar_lea.hbm %s7, %s1389
          %s1392 = sshll.u32 %s1380, 4
          %s1393 = int_to_ptr.vmem [resolvable:$true] %s1392
          %s1394 = sshll.u32 %s1390, 4
          %s1395 = int_to_ptr.hbm [resolvable:$true] %s1394
          %1397 = dma.vmem_to_hbm [thread:$0]  %s1393, 384, %s1395, %s1377
        $region52: #{tpu_custom_call.1} parent=47 // pred_fallthru
          _
      $region48: #{tpu_custom_call.1} parent=5 // pred_fallthru
        _
      %p1398 = scmp.le.s32.totalorder 2, %s16
      // Predicated region
      $region53: #{tpu_custom_call.1} parent=5 // pred_check
        %p1399 = pneg %p1398
      $region54: #{tpu_custom_call.1} parent=5 // pred_check_branch
        %1401 = sbr.rel (%p1399) target = $region56
      $region55: #{tpu_custom_call.1} parent=5 // pred_region
        %s1402 = ssub.s32 %s16, 2
        // Predicated region
        $region57: #{tpu_custom_call.1} parent=55 // pred_check
          %p1403 = pneg %p213
        $region58: #{tpu_custom_call.1} parent=55 // pred_check_branch
          %1405 = sbr.rel (%p1403) target = $region60
        $region59: #{tpu_custom_call.1} parent=55 // pred_region
          %s1406 = sand.u32 %s198, 1
          %s1407 = scalar_lea.sflag [#allocation3], %s1406
          %s1408 = sand.u32 %s198, 1
          %s1409 = smul.addr %s1408, 24
          %s1410 = scalar_lea.vmem [#allocation2], %s1409
          %1412 = dma.done %s1407, 384
        $region60: #{tpu_custom_call.1} parent=55 // pred_fallthru
          _
      $region56: #{tpu_custom_call.1} parent=5 // pred_fallthru
        _
    $region6: #{tpu_custom_call.1} parent=1 // loop_footer
      %s20 = sadd.s32 1, %s16
    $region7: #{tpu_custom_call.1} parent=1 // loop_footer_branch
      %15 = sbr.rel target = $region3
    $region8: #{tpu_custom_call.1} parent=1 // loop_exit
      _
    %1413 = vsyncpa [#allocation3], 1
    %s1414 = scalar_lea.sflag [#allocation3], 1
    %1415 = vsyncpa %s1414, 1

</llo_original>
